<compile_context>
chip_gen: v5e
topology: v5e:2x2
jax: 0.10.0
libtpu: 0.0.40
codegen_flags: <defaults>
</compile_context>

<pallas_src>
import jax
import jax.numpy as jnp
from jax import lax
from jax.experimental import pallas as pl
from jax.experimental.pallas import tpu as pltpu

NEG_SLOPE = 0.01           # nn.LeakyReLU default
H1, H2, H3 = 64, 32, 1     # hidden sizes from the module
MAX_TM = 4096              # batch-row tile cap (amortizes ~0.35us per grid step)


def _leaky_relu(x):
    return jnp.where(x >= 0, x, NEG_SLOPE * x)


def _round_up(v, m):
    return ((v + m - 1) // m) * m


def _cdiv(a, b):
    return (a + b - 1) // b


def mlp_kernel(x_ref, w1_ref, b1_ref, w2_ref, b2_ref, w3t_ref, b3_ref, o_ref):
    # x_ref: (tm, D) caller dtype ; w1_ref: (D, 64) bf16 ; everything else f32.
    # In-kernel bf16 cast (no extra HBM pass in the wrapper); MXU accumulates in f32.
    x_bf = x_ref[...].astype(jnp.bfloat16)

    # fc1 + LeakyReLU  (dropout = identity in eval mode)
    h1 = jnp.dot(x_bf, w1_ref[...], preferred_element_type=jnp.float32)
    h1 = _leaky_relu(h1 + b1_ref[...])                       # (tm, 64) f32

    # fc2 + LeakyReLU (f32; tiny, VMEM-resident)
    h2 = jnp.dot(h1, w2_ref[...], preferred_element_type=jnp.float32)
    h2 = _leaky_relu(h2 + b2_ref[...])                       # (tm, 32) f32

    # fc3 in transposed orientation: (1, 32) . (tm, 32)^T -> (1, tm), lane-dense,
    # so the bias add / sigmoid / store run at full lane occupancy.
    h3 = lax.dot_general(w3t_ref[...], h2,
                         dimension_numbers=(((1,), (1,)), ((), ())),
                         preferred_element_type=jnp.float32)
    o_ref[...] = jax.nn.sigmoid(h3 + b3_ref[...]).astype(o_ref.dtype)


def _vmem_budget():
    """Generation-aware scoped-VMEM limit."""
    cap = None
    try:
        cap = getattr(pltpu.get_tpu_info(), "vmem_capacity_bytes", None)
    except Exception:
        cap = None
    if cap is None:
        return 40 * 1024 * 1024                      # conservative: safe on v7x (64 MiB phys)
    if cap >= 100 * 1024 * 1024:                     # v5e / v6e: 128 MiB physical
        return 64 * 1024 * 1024
    return min(44 * 1024 * 1024, int(cap * 0.7))     # v7x: 64 MiB physical


def _choose_tile(batch, d, x_itemsize, vmem_limit_bytes):
    """Pick the batch row tile tm, padded output length, and grid size.

    VMEM accounting uses lane/sublane-padded footprints:
      * x tile last dim pads to a 128-lane multiple (double-buffered, caller dtype),
      * plus the in-kernel bf16 copy of the tile,
      * h1/h2 widths (64/32) pad to 128 lanes,
      * resident weights are counted double-buffered (constant index_map keeps them hot).
    """
    b8 = _round_up(batch, 8)
    d_pad = _round_up(d, 128)

    # Resident weights/biases (double-buffered): W1 bf16 (D pads to 16 sublanes, 64->128
    # lanes), W2 f32 (64x128 padded), 4 small (8,128)-padded f32 blocks (b1,b2,w3t,b3).
    weight_bytes = 2 * (_round_up(d, 16) * 128 * 2 + 64 * 128 * 4 + 4 * 8 * 128 * 4)

    per_row = (2 * d_pad * x_itemsize    # double-buffered x tile
               + d_pad * 2               # in-kernel bf16 copy of the tile
               + 2 * 128 * 4             # h1, h2 (padded to 128 lanes)
               + 32 * 4                  # transposed h2 view for fc3
               + 32)                     # output row + slack
    budget = int(vmem_limit_bytes * 0.75) - weight_bytes   # headroom for internal scratch
    rows = max(128, budget // per_row)
    tm = max(128, (min(MAX_TM, rows) // 128) * 128)

    if b8 <= tm:
        if b8 >= 1024:
            # Whole (large) batch would be a single grid step: split it so the
            # ("parallel",) axis can feed both TensorCores on v7x.
            tm = max(128, _round_up(_cdiv(b8, 2), 128))
        else:
            tm = b8                      # tiny batch: one small tile
    num_tiles = _cdiv(batch, tm)
    b_pad = num_tiles * tm
    return tm, b_pad, num_tiles


def binary_fcnn3_forward(x, params, *, vmem_limit_bytes=None):
    """x: (B, input_size). Returns (B, 1) float32 sigmoid probabilities."""
    w1, b1, w2, b2, w3, b3 = params
    B, D = x.shape
    if vmem_limit_bytes is None:
        vmem_limit_bytes = _vmem_budget()
    itemsize = jnp.dtype(x.dtype).itemsize
    tm, b_pad, num_tiles = _choose_tile(B, D, itemsize, vmem_limit_bytes)

    # Weights are tiny relative to x: converting W1 once is negligible HBM traffic.
    w1_bf16 = w1.astype(jnp.bfloat16)
    w3t = jnp.transpose(w3.astype(jnp.float32))              # (1, 32)

    full = lambda i: (0, 0)   # weights / biases: same full block every step (resident)

    bytes_accessed = int(x.size * itemsize + w1_bf16.size * 2
                         + (w2.size + w3.size + b1.size + b2.size + b3.size) * 4
                         + b_pad * 4)
    cost = pl.CostEstimate(
        flops=2 * b_pad * (D * H1 + H1 * H2 + H2 * H3),
        transcendentals=b_pad,                                # one sigmoid per row
        bytes_accessed=bytes_accessed)

    out_row = pl.pallas_call(
        mlp_kernel,
        out_shape=jax.ShapeDtypeStruct((1, b_pad), jnp.float32),
        grid_spec=pltpu.PrefetchScalarGridSpec(
            num_scalar_prefetch=0,
            grid=(num_tiles,),
            in_specs=[
                pl.BlockSpec((tm, D), lambda i: (i, 0)),      # x batch tile (caller dtype)
                pl.BlockSpec((D, H1), full),                  # W1 (bf16)
                pl.BlockSpec((1, H1), full),                  # b1
                pl.BlockSpec((H1, H2), full),                 # W2
                pl.BlockSpec((1, H2), full),                  # b2
                pl.BlockSpec((1, H2), full),                  # W3^T  (1, 32)
                pl.BlockSpec((1, H3), full),                  # b3    (1, 1)
            ],
            out_specs=pl.BlockSpec((1, tm), lambda i: (0, i)),    # lane-dense row output
        ),
        compiler_params=pltpu.CompilerParams(
            dimension_semantics=("parallel",),
            vmem_limit_bytes=vmem_limit_bytes),
        cost_estimate=cost,
    )(x, w1_bf16, b1, w2, b2, w3t, b3)

    # Ragged tail rows (if any) were computed on an unread partial block and are
    # discarded here — never reduce over or reuse them.
    return out_row[0, :B].reshape(B, 1)


def init_params(key, input_size):
    """Deterministic synthetic parameters with the shapes implied by BinaryFCNN3.
    Weights stored (in_features, out_features) so the kernel computes x @ W + b
    (equivalent to PyTorch's x @ W.T with W of shape (out, in))."""
    k1, k2, k3 = jax.random.split(key, 3)
    scale = 0.1
    w1 = scale * jax.random.normal(k1, (input_size, H1), jnp.float32)
    b1 = jnp.full((1, H1), 0.01, jnp.float32)
    w2 = scale * jax.random.normal(k2, (H1, H2), jnp.float32)
    b2 = jnp.full((1, H2), 0.02, jnp.float32)
    w3 = scale * jax.random.normal(k3, (H2, H3), jnp.float32)
    b3 = jnp.full((1, H3), 0.03, jnp.float32)
    return (w1, b1, w2, b2, w3, b3)


def reference_forward(x, params, *, match_kernel_precision=True):
    w1, b1, w2, b2, w3, b3 = params
    if match_kernel_precision:
        # Mirror the kernel's in-kernel bf16 rounding of the fc1 operands.
        x = x.astype(jnp.bfloat16).astype(jnp.float32)
        w1 = w1.astype(jnp.bfloat16).astype(jnp.float32)
    h = _leaky_relu(x @ w1 + b1)
    h = _leaky_relu(h @ w2 + b2)
    return jax.nn.sigmoid(h @ w3 + b3)


if __name__ == "__main__":
    key = jax.random.PRNGKey(0)
    kx, kp = jax.random.split(key)

    batch, input_size = 10, 32      # non-multiple-of-8 batch exercises the ragged-tail path
    x = jax.random.normal(kx, (batch, input_size), jnp.float32)
    params = init_params(kp, input_size)

    out = binary_fcnn3_forward(x, params)
    out = jax.block_until_ready(out)
    assert out.shape == (batch, 1)

    ref_match = reference_forward(x, params, match_kernel_precision=True)
    ref_f32 = reference_forward(x, params, match_kernel_precision=False)
    assert jnp.allclose(out, ref_match, atol=1e-3, rtol=1e-3), "mismatch vs matched-precision reference"
    assert jnp.allclose(out, ref_f32, atol=3e-2, rtol=3e-2), "mismatch vs f32 reference"

    print("KERNEL_OK")
</pallas_src>

<mosaic_0001>
module attributes {stable_mosaic.version = 11 : i64} {
  func.func @mlp_kernel(%arg0: i32, %arg1: memref<16x32xf32, #tpu.memory_space<vmem>>, %arg2: memref<32x64xbf16, #tpu.memory_space<vmem>>, %arg3: memref<1x64xf32, #tpu.memory_space<vmem>>, %arg4: memref<64x32xf32, #tpu.memory_space<vmem>>, %arg5: memref<1x32xf32, #tpu.memory_space<vmem>>, %arg6: memref<1x32xf32, #tpu.memory_space<vmem>>, %arg7: memref<1x1xf32, #tpu.memory_space<vmem>>, %arg8: memref<1x16xf32, #tpu.memory_space<vmem>>) attributes {dimension_semantics = [#tpu.dimension_semantics<parallel>], iteration_bounds = array<i64: 1>, scalar_prefetch = 0 : i64, scratch_operands = 0 : i64, tpu.core_type = #tpu.core_type<tc>, window_params = [{transform_indices = @transform_0, window_bounds = array<i64: 16, 32>}, {pipeline_mode = #tpu.pipeline_mode<synchronous>, transform_indices = @transform_1, window_bounds = array<i64: 32, 64>}, {pipeline_mode = #tpu.pipeline_mode<synchronous>, transform_indices = @transform_2, window_bounds = array<i64: 1, 64>}, {pipeline_mode = #tpu.pipeline_mode<synchronous>, transform_indices = @transform_3, window_bounds = array<i64: 64, 32>}, {pipeline_mode = #tpu.pipeline_mode<synchronous>, transform_indices = @transform_4, window_bounds = array<i64: 1, 32>}, {pipeline_mode = #tpu.pipeline_mode<synchronous>, transform_indices = @transform_5, window_bounds = array<i64: 1, 32>}, {pipeline_mode = #tpu.pipeline_mode<synchronous>, transform_indices = @transform_6, window_bounds = array<i64: 1, 1>}, {transform_indices = @transform_7, window_bounds = array<i64: 1, 16>}]} {
    %c0 = arith.constant 0 : index
    %c0_0 = arith.constant 0 : index
    %0 = vector.load %arg1[%c0, %c0_0] : memref<16x32xf32, #tpu.memory_space<vmem>>, vector<16x32xf32>
    %1 = arith.truncf %0 : vector<16x32xf32> to vector<16x32xbf16>
    %c0_1 = arith.constant 0 : index
    %c0_2 = arith.constant 0 : index
    %2 = vector.load %arg2[%c0_1, %c0_2] : memref<32x64xbf16, #tpu.memory_space<vmem>>, vector<32x64xbf16>
    %cst = arith.constant dense<0.000000e+00> : vector<16x64xf32>
    %3 = tpu.matmul %1, %2, %cst {dimension_numbers = #tpu.dot_dimension_numbers<[1], [0], [0], [1], [0, 0, 1, 1], [], []>} : vector<16x32xbf16>, vector<32x64xbf16>, vector<16x64xf32> -> vector<16x64xf32>
    %c0_3 = arith.constant 0 : index
    %c0_4 = arith.constant 0 : index
    %4 = vector.load %arg3[%c0_3, %c0_4] : memref<1x64xf32, #tpu.memory_space<vmem>>, vector<1x64xf32>
    %5 = vector.broadcast %4 : vector<1x64xf32> to vector<16x64xf32>
    %6 = arith.addf %3, %5 : vector<16x64xf32>
    %cst_5 = arith.constant 0.000000e+00 : f32
    %7 = vector.broadcast %cst_5 : f32 to vector<16x64xf32>
    %8 = arith.cmpf oge, %6, %7 : vector<16x64xf32>
    %cst_6 = arith.constant 0.00999999977 : f32
    %9 = vector.broadcast %cst_6 : f32 to vector<16x64xf32>
    %10 = arith.mulf %9, %6 : vector<16x64xf32>
    %11 = arith.select %8, %6, %10 : vector<16x64xi1>, vector<16x64xf32>
    %c0_7 = arith.constant 0 : index
    %c0_8 = arith.constant 0 : index
    %12 = vector.load %arg4[%c0_7, %c0_8] : memref<64x32xf32, #tpu.memory_space<vmem>>, vector<64x32xf32>
    %cst_9 = arith.constant dense<0.000000e+00> : vector<16x32xf32>
    %13 = tpu.matmul %11, %12, %cst_9 {dimension_numbers = #tpu.dot_dimension_numbers<[1], [0], [0], [1], [0, 0, 1, 1], [], []>} : vector<16x64xf32>, vector<64x32xf32>, vector<16x32xf32> -> vector<16x32xf32>
    %c0_10 = arith.constant 0 : index
    %c0_11 = arith.constant 0 : index
    %14 = vector.load %arg5[%c0_10, %c0_11] : memref<1x32xf32, #tpu.memory_space<vmem>>, vector<1x32xf32>
    %15 = vector.broadcast %14 : vector<1x32xf32> to vector<16x32xf32>
    %16 = arith.addf %13, %15 : vector<16x32xf32>
    %cst_12 = arith.constant 0.000000e+00 : f32
    %17 = vector.broadcast %cst_12 : f32 to vector<16x32xf32>
    %18 = arith.cmpf oge, %16, %17 : vector<16x32xf32>
    %cst_13 = arith.constant 0.00999999977 : f32
    %19 = vector.broadcast %cst_13 : f32 to vector<16x32xf32>
    %20 = arith.mulf %19, %16 : vector<16x32xf32>
    %21 = arith.select %18, %16, %20 : vector<16x32xi1>, vector<16x32xf32>
    %c0_14 = arith.constant 0 : index
    %c0_15 = arith.constant 0 : index
    %22 = vector.load %arg6[%c0_14, %c0_15] : memref<1x32xf32, #tpu.memory_space<vmem>>, vector<1x32xf32>
    %cst_16 = arith.constant dense<0.000000e+00> : vector<1x16xf32>
    %23 = tpu.matmul %22, %21, %cst_16 {dimension_numbers = #tpu.dot_dimension_numbers<[1], [1], [0], [0], [0, 0, 1, 0], [], []>} : vector<1x32xf32>, vector<16x32xf32>, vector<1x16xf32> -> vector<1x16xf32>
    %c0_17 = arith.constant 0 : index
    %c0_18 = arith.constant 0 : index
    %24 = vector.load %arg7[%c0_17, %c0_18] : memref<1x1xf32, #tpu.memory_space<vmem>>, vector<1x1xf32>
    %25 = vector.broadcast %24 : vector<1x1xf32> to vector<1x16xf32>
    %26 = arith.addf %23, %25 : vector<1x16xf32>
    %27 = arith.negf %26 : vector<1x16xf32>
    %28 = math.exp %27 : vector<1x16xf32>
    %cst_19 = arith.constant 1.000000e+00 : f32
    %29 = vector.broadcast %cst_19 : f32 to vector<1x16xf32>
    %30 = arith.addf %29, %28 : vector<1x16xf32>
    %31 = arith.divf %29, %30 : vector<1x16xf32>
    %c0_20 = arith.constant 0 : index
    %c0_21 = arith.constant 0 : index
    %32 = vector.load %arg8[%c0_20, %c0_21] : memref<1x16xf32, #tpu.memory_space<vmem>>, vector<1x16xf32>
    tpu.vector_store %arg8[%c0_20, %c0_21], %31 {strides = array<i32>} : memref<1x16xf32, #tpu.memory_space<vmem>>, vector<1x16xf32>,
    return
  }
  func.func @transform_0(%arg0: i32) -> (i32, i32) {
    %c0_i32 = arith.constant 0 : i32
    %c0_i32_0 = arith.constant 0 : i32
    return %arg0, %c0_i32 : i32, i32
  }
  func.func @transform_1(%arg0: i32) -> (i32, i32) {
    %c0_i32 = arith.constant 0 : i32
    %c0_i32_0 = arith.constant 0 : i32
    %c0_i32_1 = arith.constant 0 : i32
    return %c0_i32, %c0_i32_0 : i32, i32
  }
  func.func @transform_2(%arg0: i32) -> (i32, i32) {
    %c0_i32 = arith.constant 0 : i32
    %c0_i32_0 = arith.constant 0 : i32
    %c0_i32_1 = arith.constant 0 : i32
    return %c0_i32, %c0_i32_0 : i32, i32
  }
  func.func @transform_3(%arg0: i32) -> (i32, i32) {
    %c0_i32 = arith.constant 0 : i32
    %c0_i32_0 = arith.constant 0 : i32
    %c0_i32_1 = arith.constant 0 : i32
    return %c0_i32, %c0_i32_0 : i32, i32
  }
  func.func @transform_4(%arg0: i32) -> (i32, i32) {
    %c0_i32 = arith.constant 0 : i32
    %c0_i32_0 = arith.constant 0 : i32
    %c0_i32_1 = arith.constant 0 : i32
    return %c0_i32, %c0_i32_0 : i32, i32
  }
  func.func @transform_5(%arg0: i32) -> (i32, i32) {
    %c0_i32 = arith.constant 0 : i32
    %c0_i32_0 = arith.constant 0 : i32
    %c0_i32_1 = arith.constant 0 : i32
    return %c0_i32, %c0_i32_0 : i32, i32
  }
  func.func @transform_6(%arg0: i32) -> (i32, i32) {
    %c0_i32 = arith.constant 0 : i32
    %c0_i32_0 = arith.constant 0 : i32
    %c0_i32_1 = arith.constant 0 : i32
    return %c0_i32, %c0_i32_0 : i32, i32
  }
  func.func @transform_7(%arg0: i32) -> (i32, i32) {
    %c0_i32 = arith.constant 0 : i32
    %c0_i32_0 = arith.constant 0 : i32
    return %c0_i32, %arg0 : i32, i32
  }
}

</mosaic_0001>

<llo_original>
// kernel: tpu_custom_call.1
$region0: #{tpu_custom_call.1}
  #allocation0 [shape = 'u32[]', space=smem, size = 0x4, offset = 0x4, fixed_abs, tag = 'smem constant byte address 0x4 - core index']
  #allocation1 [shape = 'u32[72,128]{1,0:T(1,128)}', space=vmem, size = 0x9000, scoped, tag = 'internal scratch']
  #allocation2 [shape = 'f32[1,1]{1,0:T(1,128)S(1)}', space=vmem, size = 0x200, scoped, tag = 'scoped memory for tpu_custom_call.1']
  %s0 = inlined_call_operand.vmem [shape: f32[10,32], index: 0, kind: input, shape index: {}]
  %s1 = inlined_call_operand.vmem [shape: bf16[32,64], index: 1, kind: input, shape index: {}]
  %s2 = inlined_call_operand.vmem [shape: f32[1,64], index: 2, kind: input, shape index: {}]
  %s3 = inlined_call_operand.vmem [shape: f32[64,32], index: 3, kind: input, shape index: {}]
  %s4 = inlined_call_operand.vmem [shape: f32[1,32], index: 4, kind: input, shape index: {}]
  %s5 = inlined_call_operand.vmem [shape: f32[1,32], index: 5, kind: input, shape index: {}]
  %s6 = inlined_call_operand.<no memory space> [shape: f32[1,1], index: 6, kind: input, shape index: {}]
  %s7 = inlined_call_operand.hbm [shape: f32[1,16], index: 7, kind: output, shape index: {}]
  %s8 = sld [smem:[#allocation0]]
  $region38: #{tpu_custom_call.1} parent=0
    _
  %s10 = ssub.s32 1, %s8
  %s11 = scalar_select 0, %s10, %s8
  %v12 = vstv %s6
  %13 = vst [vmem:[#allocation2] sm:$0x1] %v12
  $region1: #{tpu_custom_call.1} parent=0
    #allocation3 [shape = 'u8[512]{0}', space=vmem, size = 0x400, scoped, tag = 'output window, operand 0, single buffered']
    #allocation4 [shape = 's32[1]{0}', space=sflag, size = 0x4, scoped, tag = 'scoped memory for tpu_custom_call.1']
    %14 = vsyncpa [#allocation4], 0
    // Predicated region
    $region2: #{tpu_custom_call.1} parent=1 // pred_check
      _
    $region3: #{tpu_custom_call.1} parent=1 // pred_check_branch
      %16 = sbr.rel (0) target = $region5
    $region4: #{tpu_custom_call.1} parent=1 // pred_region
      _
    $region5: #{tpu_custom_call.1} parent=1 // pred_fallthru
      _
    // Predicated region
    $region6: #{tpu_custom_call.1} parent=1 // pred_check
      _
    $region7: #{tpu_custom_call.1} parent=1 // pred_check_branch
      %18 = sbr.rel (0) target = $region9
    $region8: #{tpu_custom_call.1} parent=1 // pred_region
      _
    $region9: #{tpu_custom_call.1} parent=1 // pred_fallthru
      _
    // Predicated region
    $region10: #{tpu_custom_call.1} parent=1 // pred_check
      _
    $region11: #{tpu_custom_call.1} parent=1 // pred_check_branch
      %20 = sbr.rel (0) target = $region13
    $region12: #{tpu_custom_call.1} parent=1 // pred_region
      _
    $region13: #{tpu_custom_call.1} parent=1 // pred_fallthru
      _
    // Predicated region
    $region14: #{tpu_custom_call.1} parent=1 // pred_check
      _
    $region15: #{tpu_custom_call.1} parent=1 // pred_check_branch
      %22 = sbr.rel (0) target = $region17
    $region16: #{tpu_custom_call.1} parent=1 // pred_region
      _
    $region17: #{tpu_custom_call.1} parent=1 // pred_fallthru
      _
    // Predicated region
    $region18: #{tpu_custom_call.1} parent=1 // pred_check
      _
    $region19: #{tpu_custom_call.1} parent=1 // pred_check_branch
      %24 = sbr.rel (0) target = $region21
    $region20: #{tpu_custom_call.1} parent=1 // pred_region
      _
    $region21: #{tpu_custom_call.1} parent=1 // pred_fallthru
      _
    // Predicated region
    $region22: #{tpu_custom_call.1} parent=1 // pred_check
      _
    $region23: #{tpu_custom_call.1} parent=1 // pred_check_branch
      %26 = sbr.rel (0) target = $region25
    $region24: #{tpu_custom_call.1} parent=1 // pred_region
      _
    $region25: #{tpu_custom_call.1} parent=1 // pred_fallthru
      _
    // Predicated region
    $region26: #{tpu_custom_call.1} parent=1 // pred_check
      _
    $region27: #{tpu_custom_call.1} parent=1 // pred_check_branch
      %28 = sbr.rel (0) target = $region29
    $region28: #{tpu_custom_call.1} parent=1 // pred_region
      _
    $region29: #{tpu_custom_call.1} parent=1 // pred_fallthru
      _
    %v30 = vld [vmem:[%s0] sm:$0xff]
    %v31 = vld [vmem:[%s0 + $0x8] sm:$0xff]
    %v32 = vpack.c.bf16 %v31, %v30
    %v33 = vld [vmem:[%s1] sm:$0xf]
    %v34 = vld [vmem:[%s1 + $0x4] sm:$0xf]
    %v35 = vld [vmem:[%s1 + $0x8] sm:$0xf]
    %v36 = vld [vmem:[%s1 + $0xc] sm:$0xf]
    %v37 = vld [vmem:[%s2] sm:$0x1]
    %v39 = vperm.slane %v37, 0
    %v45 = vunpack.c.l.b16 %v33
    %v46 = vunpack.c.l.b16 %v34
    %v47 = vunpack.c.l.b16 %v35
    %v48 = vunpack.c.l.b16 %v36
    %v49 = vpack.c.b16 %v46, %v45
    %v50 = vpack.c.b16 %v48, %v47
    %vm53 = vcmask 261120
    %v55 = vsel %vm53, %v32, 0
    %57 = vmatpush.bf16.msra.mxu0 0
    %58 = vmatpush.bf16.msra.mxu0 0
    %59 = vmatpush.bf16.msra.mxu0 0
    %60 = vmatpush.bf16.msra.mxu0 0
    %61 = vmatpush.bf16.msra.mxu0 0
    %62 = vmatpush.bf16.msra.mxu0 0
    %63 = vmatpush.bf16.msra.mxu0 %v50
    %64 = vmatpush.bf16.msra.mxu0 %v49
    %65 = vmatmul.bf16.gmra.mxu0 %v55
    %v66 = vpop.f32.mrf.mxu0
    %v67 = vadd.f32 %v39, %v66
    %v68 = vpop.f32.mrf.mxu0
    %v69 = vadd.f32 %v39, %v68
    %70 = vdwg.mxu0
    %vm71 = vcmp.ge.f32.partialorder %v67, 0.0
    %vm72 = vcmp.ge.f32.partialorder %v69, 0.0
    %v73 = vmul.f32 %v67, 0.01
    %v74 = vmul.f32 %v69, 0.01
    %v75 = vsel %vm71, %v67, %v73
    %v76 = vsel %vm72, %v69, %v74
    %v77 = vld [vmem:[%s3] sm:$0xff]
    %v78 = vld [vmem:[%s3 + $0x8] sm:$0xff]
    %v79 = vld [vmem:[%s3 + $0x10] sm:$0xff]
    %v80 = vld [vmem:[%s3 + $0x18] sm:$0xff]
    %v81 = vld [vmem:[%s3 + $0x20] sm:$0xff]
    %v82 = vld [vmem:[%s3 + $0x28] sm:$0xff]
    %v83 = vld [vmem:[%s3 + $0x30] sm:$0xff]
    %v84 = vld [vmem:[%s3 + $0x38] sm:$0xff]
    %v85 = vld [vmem:[%s4] sm:$0x1]
    %v87 = vperm.slane %v85, 0
    %vm89 = vcmask 523264
    %v91 = vsel %vm89, %v75, 0
    %v94 = vsel %vm89, %v76, 0
    %96 = vmatpush.msra.mxu0 0.0
    %97 = vmatpush.msra.mxu0 0.0
    %98 = vmatpush.msra.mxu0 0.0
    %99 = vmatpush.msra.mxu0 0.0
    %100 = vmatpush.msra.mxu0 0.0
    %101 = vmatpush.msra.mxu0 0.0
    %102 = vmatpush.msra.mxu0 0.0
    %103 = vmatpush.msra.mxu0 0.0
    %104 = vmatpush.msra.mxu0 %v84
    %105 = vmatpush.msra.mxu0 %v83
    %106 = vmatpush.msra.mxu0 %v82
    %107 = vmatpush.msra.mxu0 %v81
    %108 = vmatpush.msra.mxu0 %v80
    %109 = vmatpush.msra.mxu0 %v79
    %110 = vmatpush.msra.mxu0 %v78
    %111 = vmatpush.msra.mxu0 %v77
    %112 = vmatmul.f32.gmra.mxu0 %v91
    %v113 = vpop.f32.mrf.mxu0
    %v114 = vadd.f32 %v87, %v113
    %115 = vmatmul.f32.gmra.mxu0 %v94
    %v116 = vpop.f32.mrf.mxu0
    %v117 = vadd.f32 %v87, %v116
    %118 = vdwg.mxu0
    %vm119 = vcmp.ge.f32.partialorder %v114, 0.0
    %vm120 = vcmp.ge.f32.partialorder %v117, 0.0
    %v121 = vmul.f32 %v114, 0.01
    %v122 = vmul.f32 %v117, 0.01
    %v123 = vsel %vm119, %v114, %v121
    %v124 = vsel %vm120, %v117, %v122
    %v125 = vld [vmem:[%s5] sm:$0x1]
    %v126 = vld [vmem:[#allocation2] sm:$0x1]
    %128 = vset.pattern.permute.xlu0 0
    %129 = vperm.xlu0 %128, %v126
    %v130 = vpop.permute.xlu0 %129
    %v132 = vperm.slane %v130, 0
    %v134 = vsel %vm53, %v125, 0
    %v137 = vsel %vm53, %v123, 0
    %v140 = vsel %vm53, %v124, 0
    %142 = vmatpush.xpose.msra.mxu0 0.0
    %143 = vmatpush.xpose.msra.mxu0 0.0
    %144 = vmatpush.xpose.msra.mxu0 0.0
    %145 = vmatpush.xpose.msra.mxu0 0.0
    %146 = vmatpush.xpose.msra.mxu0 0.0
    %147 = vmatpush.xpose.msra.mxu0 0.0
    %148 = vmatpush.xpose.msra.mxu0 0.0
    %149 = vmatpush.xpose.msra.mxu0 0.0
    %150 = vmatpush.xpose.msra.mxu0 0.0
    %151 = vmatpush.xpose.msra.mxu0 0.0
    %152 = vmatpush.xpose.msra.mxu0 0.0
    %153 = vmatpush.xpose.msra.mxu0 0.0
    %154 = vmatpush.xpose.msra.mxu0 0.0
    %155 = vmatpush.xpose.msra.mxu0 0.0
    %156 = vmatpush.xpose.msra.mxu0 %v140
    %157 = vmatpush.xpose.msra.mxu0 %v137
    %158 = vmatmul.f32.gmra.mxu0 %v134
    %v159 = vpop.f32.mrf.mxu0
    %v160 = vadd.f32 %v132, %v159
    %161 = vdwg.mxu0
    %v162 = vxor.u32 %v160, 2147483648
    %v163 = vmul.f32 %v162, 1.442695
    %v164 = vpow.pop %v163
    %v165 = vadd.f32 %v164, 1.0
    %v166 = vrcp.pop %v165
    %v167 = vmul.f32 %v165, %v166
    %v168 = vsub.f32 1.0, %v167
    %v169 = vmul.f32 %v166, %v168
    %v170 = vadd.f32 %v166, %v169
    %vm171 = vweird.f32 %v165
    %vm172 = vweird.f32 %v166
    %vm173 = vmor %vm171, %vm172
    %v174 = vsel %vm173, %v166, %v170
    %v175 = vand.u32 2147483647, %v165
    %vm176 = vcmp.eq.f32.partialorder %v175, 8.507059e+37
    %v177 = vand.u32 %v165, 2147483648
    %v178 = vor.u32 1.1754944e-38, %v177
    %v179 = vsel %vm176, %v178, %v174
    %v180 = vmul.f32 1.0, %v179
    %vm181 = vcmask 122880
    %182 = vst.msk [vmem:[#allocation3] sm:$0x1] %vm181, %v180
    // Predicated region
    $region30: #{tpu_custom_call.1} parent=1 // pred_check
      _
    $region31: #{tpu_custom_call.1} parent=1 // pred_check_branch
      %184 = sbr.rel (0) target = $region33
    $region32: #{tpu_custom_call.1} parent=1 // pred_region
      %186 = vsyncadd [#allocation4], 0
      %s188 = sshll.u32 [#allocation3], 4
      %s189 = int_to_ptr.vmem [resolvable:$true] %s188
      %s190 = sshll.u32 %s7, 4
      %s191 = int_to_ptr.hbm [resolvable:$true] %s190
      %193 = dma.vmem_to_hbm [thread:$0]  %s189, 16, %s191, [#allocation4]
    $region33: #{tpu_custom_call.1} parent=1 // pred_fallthru
      _
    // Predicated region
    $region34: #{tpu_custom_call.1} parent=1 // pred_check
      _
    $region35: #{tpu_custom_call.1} parent=1 // pred_check_branch
      %195 = sbr.rel (0) target = $region37
    $region36: #{tpu_custom_call.1} parent=1 // pred_region
      %197 = dma.done [#allocation4], 16
    $region37: #{tpu_custom_call.1} parent=1 // pred_fallthru
      _
    %198 = vsyncpa [#allocation4], 1

</llo_original>
